<compile_context>
chip_gen: v7x
topology: tpu7x:2x2x1
jax: 0.10.0
libtpu: 0.0.40
codegen_flags: <defaults>
</compile_context>

<pallas_src>
import jax
import jax.numpy as jnp
from jax.experimental import pallas as pl
from jax.experimental.pallas import tpu as pltpu


# ----------------------------- Pallas kernel --------------------------------
def _readvec_proj_kernel(rv_ref, wr_ref, o_ref):
    # rv_ref: (m, K) VMEM, wr_ref: (K, N) VMEM, o_ref: (m, N) VMEM.
    # One MXU matmul with f32 accumulation.
    o_ref[...] = jnp.dot(
        rv_ref[...], wr_ref[...], preferred_element_type=jnp.float32
    ).astype(o_ref.dtype)


def _cost(m, k, n, itemsize=4):
    return pl.CostEstimate(
        flops=2 * m * k * n,
        transcendentals=0,
        bytes_accessed=itemsize * (m * k + k * n + m * n),
    )


# -------------------------- Single-step forward ------------------------------
def memwrapper_forward(read_vec, W_r):
    """Pallas equivalent of memwrapper.forward's projection matmul.

    read_vec: (bs, R, W) float32 -- output of the (external) Memory module
    W_r     : (W*R, v_t) float32 -- learned projection parameter
    returns : (bs, v_t)  float32
    """
    bs, R, W = read_vec.shape
    WR, v_t = W_r.shape
    assert WR == W * R

    rv = read_vec.reshape(bs, WR)  # fuses into the pallas_call's input

    return pl.pallas_call(
        _readvec_proj_kernel,
        out_shape=jax.ShapeDtypeStruct((bs, v_t), jnp.float32),
        # Gridless: whole arrays live in VMEM as single blocks (tiny shapes),
        # no pipeline/double-buffer setup, no (8,128) padding needed on the
        # wrapper side.
        in_specs=[
            pl.BlockSpec(memory_space=pltpu.MemorySpace.VMEM),
            pl.BlockSpec(memory_space=pltpu.MemorySpace.VMEM),
        ],
        out_specs=pl.BlockSpec(memory_space=pltpu.MemorySpace.VMEM),
        cost_estimate=_cost(bs, WR, v_t),
    )(rv, W_r)


# ------------------------ Batched (multi-timestep) ----------------------------
def memwrapper_forward_batched(read_vec_steps, W_r, *, tile_m=256):
    """Project T stacked timesteps of read vectors in one pallas_call.

    read_vec_steps: (T, bs, R, W) float32
    W_r           : (W*R, v_t)    float32
    returns       : (T, bs, v_t)  float32

    W_r stays VMEM-resident across the whole grid (index_map -> (0, 0));
    the M axis is "parallel" so v7x shards it across its 2 TensorCores.
    """
    T, bs, R, W = read_vec_steps.shape
    WR, v_t = W_r.shape
    assert WR == W * R

    M = T * bs
    rv = read_vec_steps.reshape(M, WR)

    tm = min(tile_m, M)
    if tm % 8 != 0 or M % tm != 0:
        # Small / ragged batch: fall back to the gridless whole-array path.
        out = pl.pallas_call(
            _readvec_proj_kernel,
            out_shape=jax.ShapeDtypeStruct((M, v_t), jnp.float32),
            in_specs=[
                pl.BlockSpec(memory_space=pltpu.MemorySpace.VMEM),
                pl.BlockSpec(memory_space=pltpu.MemorySpace.VMEM),
            ],
            out_specs=pl.BlockSpec(memory_space=pltpu.MemorySpace.VMEM),
            cost_estimate=_cost(M, WR, v_t),
        )(rv, W_r)
        return out.reshape(T, bs, v_t)

    out = pl.pallas_call(
        _readvec_proj_kernel,
        out_shape=jax.ShapeDtypeStruct((M, v_t), jnp.float32),
        grid=(M // tm,),
        in_specs=[
            # Activation rows: one (tm, WR) tile per grid step.  WR equals the
            # full K dim, so no 128-divisibility issue on the last axis.
            pl.BlockSpec((tm, WR), lambda i: (i, 0)),
            # Weight: same block for every grid step -> stays VMEM-resident.
            pl.BlockSpec((WR, v_t), lambda i: (0, 0)),
        ],
        out_specs=pl.BlockSpec((tm, v_t), lambda i: (i, 0)),
        compiler_params=pltpu.CompilerParams(
            dimension_semantics=("parallel",),  # shard M across TCs on v7x
        ),
        cost_estimate=_cost(M, WR, v_t),
    )(rv, W_r)
    return out.reshape(T, bs, v_t)


# ------------------------------- Driver --------------------------------------
if __name__ == "__main__":
    # Small, deterministic shapes consistent with the module:
    #   param.bs = 2, param.R = 4, param.W = 16, param.v_t = 32
    bs, R, W, v_t = 2, 4, 16, 32

    key = jax.random.PRNGKey(0)
    k_rv, k_wr, k_seq = jax.random.split(key, 3)

    # read_vec stands in for the (undefined) Memory module's output.
    read_vec = jax.random.normal(k_rv, (bs, R, W), dtype=jnp.float32)

    # NOTE: the original __init__ zero-initializes W_r; a small deterministic
    # random init is used so the matmul result is non-trivial and checkable.
    W_r = 0.1 * jax.random.normal(k_wr, (W * R, v_t), dtype=jnp.float32)

    # --- Single DNC timestep (exact parity with the PyTorch numerics) -------
    out = memwrapper_forward(read_vec, W_r)
    out = jax.block_until_ready(out)
    ref = jnp.matmul(read_vec.reshape(bs, W * R), W_r)
    assert out.shape == (bs, v_t)
    assert jnp.allclose(out, ref, atol=1e-5, rtol=1e-5)

    # --- Batched path: T stacked timesteps, one pallas_call ------------------
    T = 64  # M = T*bs = 128 rows -> one 128-row MXU tile per grid step
    read_vec_steps = jax.random.normal(k_seq, (T, bs, R, W), dtype=jnp.float32)
    out_b = memwrapper_forward_batched(read_vec_steps, W_r, tile_m=256)
    out_b = jax.block_until_ready(out_b)
    ref_b = jnp.matmul(read_vec_steps.reshape(T * bs, W * R), W_r).reshape(
        T, bs, v_t
    )
    assert out_b.shape == (T, bs, v_t)
    assert jnp.allclose(out_b, ref_b, atol=1e-5, rtol=1e-5)

    print("KERNEL_OK")
</pallas_src>

<mosaic_0001>
module attributes {stable_mosaic.version = 11 : i64} {
  func.func @_readvec_proj_kernel(%arg0: memref<2x64xf32, #tpu.memory_space<vmem>>, %arg1: memref<64x32xf32, #tpu.memory_space<vmem>>, %arg2: memref<2x32xf32, #tpu.memory_space<vmem>>) attributes {dimension_semantics = [], scalar_prefetch = 0 : i64, scratch_operands = 0 : i64, tpu.core_type = #tpu.core_type<tc>} {
    %c0 = arith.constant 0 : index
    %c0_0 = arith.constant 0 : index
    %0 = vector.load %arg0[%c0, %c0_0] : memref<2x64xf32, #tpu.memory_space<vmem>>, vector<2x64xf32>
    %c0_1 = arith.constant 0 : index
    %c0_2 = arith.constant 0 : index
    %1 = vector.load %arg1[%c0_1, %c0_2] : memref<64x32xf32, #tpu.memory_space<vmem>>, vector<64x32xf32>
    %cst = arith.constant dense<0.000000e+00> : vector<2x32xf32>
    %2 = tpu.matmul %0, %1, %cst {dimension_numbers = #tpu.dot_dimension_numbers<[1], [0], [0], [1], [0, 0, 1, 1], [], []>} : vector<2x64xf32>, vector<64x32xf32>, vector<2x32xf32> -> vector<2x32xf32>
    %c0_3 = arith.constant 0 : index
    %c0_4 = arith.constant 0 : index
    %3 = vector.load %arg2[%c0_3, %c0_4] : memref<2x32xf32, #tpu.memory_space<vmem>>, vector<2x32xf32>
    tpu.vector_store %arg2[%c0_3, %c0_4], %2 {strides = array<i32>} : memref<2x32xf32, #tpu.memory_space<vmem>>, vector<2x32xf32>,
    return
  }
}

</mosaic_0001>

<llo_original>
// kernel: tpu_custom_call.1
$region0: #{tpu_custom_call.1}
  #allocation0 [shape = 'u32[]', space=smem, size = 0x4, offset = 0x4, fixed_abs, tag = 'smem constant byte address 0x4 - core index']
  #allocation1 [shape = 'u32[144,128]{1,0:T(1,128)}', space=vmem, size = 0x12000, scoped, tag = 'internal scratch']
  %s0 = inlined_call_operand.vmem [shape: f32[2,64], index: 0, kind: input, shape index: {}]
  %s1 = inlined_call_operand.vmem [shape: f32[64,32], index: 1, kind: input, shape index: {}]
  %s2 = inlined_call_operand.hbm [shape: f32[2,32], index: 2, kind: output, shape index: {}]
  %s3 = sld [smem:[#allocation0]]
  $region18: #{tpu_custom_call.1} parent=0
    _
  %s5 = ssub.s32 1, %s3
  %s6 = scalar_select 0, %s5, %s3
  $region1: #{tpu_custom_call.1} parent=0
    #allocation2 [shape = 'u8[1024]{0}', space=vmem, size = 0x400, scoped, tag = 'output window, operand 0, single buffered']
    #allocation3 [shape = 's32[1]{0}', space=sflag, size = 0x4, scoped, tag = 'scoped memory for tpu_custom_call.1']
    %7 = vsyncpa [#allocation3], 0
    // Predicated region
    $region2: #{tpu_custom_call.1} parent=1 // pred_check
      _
    $region3: #{tpu_custom_call.1} parent=1 // pred_check_branch
      %9 = sbr.rel (0) target = $region5
    $region4: #{tpu_custom_call.1} parent=1 // pred_region
      _
    $region5: #{tpu_custom_call.1} parent=1 // pred_fallthru
      _
    // Predicated region
    $region6: #{tpu_custom_call.1} parent=1 // pred_check
      _
    $region7: #{tpu_custom_call.1} parent=1 // pred_check_branch
      %11 = sbr.rel (0) target = $region9
    $region8: #{tpu_custom_call.1} parent=1 // pred_region
      _
    $region9: #{tpu_custom_call.1} parent=1 // pred_fallthru
      _
    %v12 = vld [vmem:[%s0] sm:$0x3]
    %v13 = vld [vmem:[%s1] sm:$0xff]
    %v14 = vld [vmem:[%s1 + $0x8] sm:$0xff]
    %v15 = vld [vmem:[%s1 + $0x10] sm:$0xff]
    %v16 = vld [vmem:[%s1 + $0x18] sm:$0xff]
    %v17 = vld [vmem:[%s1 + $0x20] sm:$0xff]
    %v18 = vld [vmem:[%s1 + $0x28] sm:$0xff]
    %v19 = vld [vmem:[%s1 + $0x30] sm:$0xff]
    %v20 = vld [vmem:[%s1 + $0x38] sm:$0xff]
    %vm21 = vcmask 523264
    %v23 = vsel %vm21, %v12, 0
    %25 = vmatprep.subr.mxu0 0.0
    %26 = vmatpush1.msra.mxu0 %v13
    %27 = vmatprep.subr.mxu0 0.0
    %28 = vmatpush1.msra.mxu0 %v14
    %29 = vmatprep.subr.mxu0 0.0
    %30 = vmatpush1.msra.mxu0 %v15
    %31 = vmatprep.subr.mxu0 0.0
    %32 = vmatpush1.msra.mxu0 %v16
    %33 = vmatprep.subr.mxu0 0.0
    %34 = vmatpush1.msra.mxu0 %v17
    %35 = vmatprep.subr.mxu0 0.0
    %36 = vmatpush1.msra.mxu0 %v18
    %37 = vmatprep.subr.mxu0 0.0
    %38 = vmatpush1.msra.mxu0 %v19
    %39 = vmatprep.subr.mxu0 0.0
    %40 = vmatpush1.msra.mxu0 %v20
    %41 = vmatprep.subr.mxu0 0.0
    %42 = vmatpush1.msra.mxu0 0.0
    %43 = vmatprep.subr.mxu0 0.0
    %44 = vmatpush1.msra.mxu0 0.0
    %45 = vmatprep.subr.mxu0 0.0
    %46 = vmatpush1.msra.mxu0 0.0
    %47 = vmatprep.subr.mxu0 0.0
    %48 = vmatpush1.msra.mxu0 0.0
    %49 = vmatprep.subr.mxu0 0.0
    %50 = vmatpush1.msra.mxu0 0.0
    %51 = vmatprep.subr.mxu0 0.0
    %52 = vmatpush1.msra.mxu0 0.0
    %53 = vmatprep.subr.mxu0 0.0
    %54 = vmatpush1.msra.mxu0 0.0
    %55 = vmatprep.subr.mxu0 0.0
    %56 = vmatpush1.msra.mxu0 0.0
    %57 = vmatprep.subr.mxu0 0.0
    %58 = vmatpush1.msra.mxu0 0.0
    %59 = vmatprep.subr.mxu0 0.0
    %60 = vmatpush1.msra.mxu0 0.0
    %61 = vmatprep.subr.mxu0 0.0
    %62 = vmatpush1.msra.mxu0 0.0
    %63 = vmatprep.subr.mxu0 0.0
    %64 = vmatpush1.msra.mxu0 0.0
    %65 = vmatprep.subr.mxu0 0.0
    %66 = vmatpush1.msra.mxu0 0.0
    %67 = vmatprep.subr.mxu0 0.0
    %68 = vmatpush1.msra.mxu0 0.0
    %69 = vmatprep.subr.mxu0 0.0
    %70 = vmatpush1.msra.mxu0 0.0
    %71 = vmatprep.subr.mxu0 0.0
    %72 = vmatpush1.msra.mxu0 0.0
    %73 = vmatprep.subr.mxu0 0.0
    %74 = vmatpush1.msra.mxu0 0.0
    %75 = vmatprep.subr.mxu0 0.0
    %76 = vmatpush1.msra.mxu0 0.0
    %77 = vmatprep.subr.mxu0 0.0
    %78 = vmatpush1.msra.mxu0 0.0
    %79 = vmatprep.subr.mxu0 0.0
    %80 = vmatpush1.msra.mxu0 0.0
    %81 = vmatprep.subr.mxu0 0.0
    %82 = vmatpush1.msra.mxu0 0.0
    %83 = vmatprep.subr.mxu0 0.0
    %84 = vmatpush1.msra.mxu0 0.0
    %85 = vmatprep.subr.mxu0 0.0
    %86 = vmatpush1.msra.mxu0 0.0
    %87 = vmatprep.subr.mxu0 0.0
    %88 = vmatpush1.msra.mxu0 0.0
    %89 = vmatprep.mubr.f32.mxu0 0.0
    %90 = vmatmul.mubr.f32.gmra.mrb[0].mxu0 %v23
    %v91 = vpop.f32.mrb[0].mxu0
    %v92 = vadd.f32 0.0, %v91
    %v93 = vpop.f32.mrb[0].mxu0
    %94 = vdwg.mxu0
    %vm95 = vcmask 254976
    %96 = vst.msk [vmem:[#allocation2] sm:$0x3] %vm95, %v92
    // Predicated region
    $region10: #{tpu_custom_call.1} parent=1 // pred_check
      _
    $region11: #{tpu_custom_call.1} parent=1 // pred_check_branch
      %98 = sbr.rel (0) target = $region13
    $region12: #{tpu_custom_call.1} parent=1 // pred_region
      %s100 = ssub.s32 32, 32
      %101 = vsyncadd [#allocation3], %s100
      %s103 = sshll.u32 [#allocation2], 4
      %s104 = int_to_ptr.vmem [resolvable:$true] %s103
      %106 = dma.vmem_to_hbm [thread:$0]  %s104, 32, %s2, [#allocation3]
    $region13: #{tpu_custom_call.1} parent=1 // pred_fallthru
      _
    // Predicated region
    $region14: #{tpu_custom_call.1} parent=1 // pred_check
      _
    $region15: #{tpu_custom_call.1} parent=1 // pred_check_branch
      %108 = sbr.rel (0) target = $region17
    $region16: #{tpu_custom_call.1} parent=1 // pred_region
      %109 = dma.done [#allocation3], 32
    $region17: #{tpu_custom_call.1} parent=1 // pred_fallthru
      _
    %110 = vsyncpa [#allocation3], 1

</llo_original>
